<compile_context>
chip_gen: v7x
topology: tpu7x:2x2x1
jax: 0.10.0
libtpu: 0.0.40
codegen_flags: <defaults>
</compile_context>

<pallas_src>
import jax
import jax.numpy as jnp
from jax import lax
from jax.experimental import pallas as pl
from jax.experimental.pallas import tpu as pltpu

FEATS = 20


def fancy_mlp_kernel(x_ref, mask_ref, w1_ref, b1_ref, w2_ref, b2_ref,
                     out_ref, acc_s_ref, acc_q_ref):
    step = pl.program_id(0)
    nsteps = pl.num_programs(0)

    @pl.when(step == 0)
    def _init():
        acc_s_ref[...] = jnp.zeros_like(acc_s_ref)
        acc_q_ref[...] = jnp.zeros_like(acc_q_ref)

    x = x_ref[...]                                   # (TB, 20) f32
    # Fused first Linear + constant matmul:  relu(x @ (W^T C) + (b C + 1))
    h = jnp.maximum(
        jnp.dot(x, w1_ref[...], preferred_element_type=jnp.float32)
        + b1_ref[...], 0.0)
    # Second (shared) Linear:  h @ W^T + b
    h = jnp.dot(h, w2_ref[...], preferred_element_type=jnp.float32) + b2_ref[...]
    # Zero out padded batch rows so they contribute nothing to the sums.
    h = h * mask_ref[...]

    tb = x.shape[0]                                  # static tile size
    # Fused reductions: one cross-lane pass over [h ; h*h].
    stacked = jnp.concatenate([h, h * h], axis=0)    # (2*TB, 20)
    lane_red = jnp.sum(stacked, axis=1, keepdims=True)   # (2*TB, 1)
    acc_s_ref[...] += jnp.sum(lane_red[:tb, :], axis=0, keepdims=True)  # sum(h)
    acc_q_ref[...] += jnp.sum(lane_red[tb:, :], axis=0, keepdims=True)  # sum(h*h)

    @pl.when(step == nsteps - 1)
    def _finalize():
        total_s = acc_s_ref[...]                     # (1,1) sum(h)
        nrm2 = acc_q_ref[...]                        # (1,1) sum(h*h)
        # Keep the rounded sqrt so the >1.0 / <0.8 thresholds match torch.norm()
        nrm = jnp.sqrt(nrm2)

        # Closed-form halving count (replaces the while loop):
        # k = smallest k >= 0 with nrm * 2^-k <= 1  ==  max(E + (mant != 0), 0)
        bits = pltpu.bitcast(nrm, jnp.int32)         # nrm >= 0 -> sign bit 0
        exp_field = jnp.right_shift(bits, 23)        # biased exponent (0..255)
        mant = jnp.bitwise_and(bits, 0x7FFFFF)
        k = (exp_field - 127) + (mant != 0).astype(jnp.int32)
        k = jnp.clip(k, 0, 126)                      # finite norms give k <= 64
        # scale = 2^-k built exactly from the exponent bits.
        scale = pltpu.bitcast(jnp.left_shift(127 - k, 23), jnp.float32)

        # if ||h|| < 0.8: h *= 10   (nrm * 2^-k is exact exponent arithmetic)
        scale = jnp.where(nrm * scale < 0.8, scale * 10.0, scale)

        out_ref[...] = total_s * scale


def prepare_params(w_lin, b_lin, w_const):
    """Hoisted / cacheable precompute: fuse Linear #1 with the constant matmul."""
    wlin_t = jnp.transpose(w_lin)                       # (20,20): Linear is x @ W^T
    w_fused = jnp.dot(wlin_t, w_const)                  # (x @ W^T) @ C == x @ (W^T C)
    b_fused = (jnp.dot(b_lin, w_const) + 1.0).reshape(1, FEATS)
    b_out = b_lin.reshape(1, FEATS)
    return w_fused, b_fused, wlin_t, b_out


def fancy_mlp(x, params, *, tb_cap=512):
    """x: (B, 20) f32; params from prepare_params(). Returns scalar f32."""
    w_fused, b_fused, w_out, b_out = params
    B = x.shape[0]

    # Tile the batch. Tiles are 20*TB*4 bytes (~40 KiB at TB=512), far under the
    # scoped-VMEM limit on every generation (v7x 64 MiB included).
    tb = B if B <= tb_cap else tb_cap
    num_tiles = pl.cdiv(B, tb)
    bp = num_tiles * tb

    mask = jnp.ones((B, 1), jnp.float32)
    if bp != B:
        # Pad to a multiple of TB; padded rows are masked out in-kernel
        # (a zero input row does NOT produce a zero h because of the biases).
        x = jnp.pad(x, ((0, bp - B), (0, 0)))
        mask = jnp.pad(mask, ((0, bp - B), (0, 0)))

    out = pl.pallas_call(
        fancy_mlp_kernel,
        out_shape=jax.ShapeDtypeStruct((1, 1), jnp.float32),
        grid_spec=pltpu.PrefetchScalarGridSpec(
            num_scalar_prefetch=0,
            grid=(num_tiles,),
            in_specs=[
                pl.BlockSpec((tb, FEATS), lambda i: (i, 0)),      # x tile
                pl.BlockSpec((tb, 1), lambda i: (i, 0)),          # row-valid mask
                pl.BlockSpec((FEATS, FEATS), lambda i: (0, 0)),   # fused W1 = W^T C
                pl.BlockSpec((1, FEATS), lambda i: (0, 0)),       # fused b1 = b C + 1
                pl.BlockSpec((FEATS, FEATS), lambda i: (0, 0)),   # W^T (second Linear)
                pl.BlockSpec((1, FEATS), lambda i: (0, 0)),       # b   (second Linear)
            ],
            out_specs=pl.BlockSpec((1, 1), lambda i: (0, 0)),
            scratch_shapes=[pltpu.VMEM((1, 1), jnp.float32),      # running sum(h)
                            pltpu.VMEM((1, 1), jnp.float32)],     # running sum(h*h)
        ),
        # Batch axis carries the accumulator scratch -> must be "arbitrary"
        # (marking it "parallel" on v7x's 2 TCs would race on the accumulators).
        compiler_params=pltpu.CompilerParams(
            dimension_semantics=("arbitrary",)),
    )(x, mask, w_fused, b_fused, w_out, b_out)
    return out[0, 0]


def reference(x, w_lin, b_lin, w_const):
    """Literal (unfused) translation of the PyTorch forward for validation."""
    h = x @ w_lin.T + b_lin
    h = jnp.maximum(h @ w_const + 1.0, 0.0)
    h = h @ w_lin.T + b_lin
    h = lax.while_loop(lambda hh: jnp.sqrt(jnp.sum(hh * hh)) > 1.0,
                       lambda hh: hh / 2.0, h)
    h = jnp.where(jnp.sqrt(jnp.sum(h * h)) < 0.8, h * 10.0, h)
    return jnp.sum(h)


if __name__ == "__main__":
    key = jax.random.PRNGKey(0)
    k_x, k_c, k_w, k_b, k_x2 = jax.random.split(key, 5)

    # self.weight = torch.rand(20, 20)  -> uniform [0, 1)
    w_const = jax.random.uniform(k_c, (FEATS, FEATS), dtype=jnp.float32)

    # nn.Linear(20, 20): default init ~ U(-1/sqrt(20), 1/sqrt(20))
    bound = 1.0 / jnp.sqrt(jnp.float32(FEATS))
    w_lin = jax.random.uniform(k_w, (FEATS, FEATS), dtype=jnp.float32,
                               minval=-bound, maxval=bound)
    b_lin = jax.random.uniform(k_b, (FEATS,), dtype=jnp.float32,
                               minval=-bound, maxval=bound)

    params = prepare_params(w_lin, b_lin, w_const)

    # --- primary small-shape check (batch = 2, single grid step) ---
    B = 2
    x = jax.random.normal(k_x, (B, FEATS), dtype=jnp.float32)
    out = fancy_mlp(x, params)
    jax.block_until_ready(out)
    ref = reference(x, w_lin, b_lin, w_const)
    assert jnp.allclose(out, ref, rtol=1e-4, atol=1e-4), (out, ref)

    # --- multi-tile check (exercises grid accumulation + padded-row masking) ---
    B2 = 300
    x2 = jax.random.normal(k_x2, (B2, FEATS), dtype=jnp.float32)
    out2 = fancy_mlp(x2, params, tb_cap=128)   # 3 grid steps, 84 padded rows
    jax.block_until_ready(out2)
    ref2 = reference(x2, w_lin, b_lin, w_const)
    assert jnp.allclose(out2, ref2, rtol=1e-4, atol=1e-4), (out2, ref2)

    print("KERNEL_OK")
</pallas_src>

<mosaic_0001>
module attributes {stable_mosaic.version = 11 : i64} {
  func.func @fancy_mlp_kernel(%arg0: i32, %arg1: memref<2x20xf32, #tpu.memory_space<vmem>>, %arg2: memref<2x1xf32, #tpu.memory_space<vmem>>, %arg3: memref<20x20xf32, #tpu.memory_space<vmem>>, %arg4: memref<1x20xf32, #tpu.memory_space<vmem>>, %arg5: memref<20x20xf32, #tpu.memory_space<vmem>>, %arg6: memref<1x20xf32, #tpu.memory_space<vmem>>, %arg7: memref<1x1xf32, #tpu.memory_space<vmem>>, %arg8: memref<1x1xf32, #tpu.memory_space<vmem>>, %arg9: memref<1x1xf32, #tpu.memory_space<vmem>>) attributes {dimension_semantics = [#tpu.dimension_semantics<arbitrary>], iteration_bounds = array<i64: 1>, scalar_prefetch = 0 : i64, scratch_operands = 2 : i64, tpu.core_type = #tpu.core_type<tc>, window_params = [{transform_indices = @transform_0, window_bounds = array<i64: 2, 20>}, {transform_indices = @transform_1, window_bounds = array<i64: 2, 1>}, {pipeline_mode = #tpu.pipeline_mode<synchronous>, transform_indices = @transform_2, window_bounds = array<i64: 20, 20>}, {pipeline_mode = #tpu.pipeline_mode<synchronous>, transform_indices = @transform_3, window_bounds = array<i64: 1, 20>}, {pipeline_mode = #tpu.pipeline_mode<synchronous>, transform_indices = @transform_4, window_bounds = array<i64: 20, 20>}, {pipeline_mode = #tpu.pipeline_mode<synchronous>, transform_indices = @transform_5, window_bounds = array<i64: 1, 20>}, {pipeline_mode = #tpu.pipeline_mode<synchronous>, transform_indices = @transform_6, window_bounds = array<i64: 1, 1>}]} {
    %c0_i32 = arith.constant 0 : i32
    %0 = arith.cmpi eq, %arg0, %c0_i32 : i32
    %1 = arith.extui %0 : i1 to i32
    %c0_i32_0 = arith.constant 0 : i32
    %2 = arith.cmpi ne, %1, %c0_i32_0 : i32
    scf.if %2 {
      %cst_27 = arith.constant 0.000000e+00 : f32
      %38 = vector.broadcast %cst_27 : f32 to vector<1x1xf32>
      %c0_28 = arith.constant 0 : index
      %c0_29 = arith.constant 0 : index
      %39 = vector.load %arg8[%c0_28, %c0_29] : memref<1x1xf32, #tpu.memory_space<vmem>>, vector<1x1xf32>
      tpu.vector_store %arg8[%c0_28, %c0_29], %38 {strides = array<i32>} : memref<1x1xf32, #tpu.memory_space<vmem>>, vector<1x1xf32>,
      %cst_30 = arith.constant 0.000000e+00 : f32
      %40 = vector.broadcast %cst_30 : f32 to vector<1x1xf32>
      %c0_31 = arith.constant 0 : index
      %c0_32 = arith.constant 0 : index
      %41 = vector.load %arg9[%c0_31, %c0_32] : memref<1x1xf32, #tpu.memory_space<vmem>>, vector<1x1xf32>
      tpu.vector_store %arg9[%c0_31, %c0_32], %40 {strides = array<i32>} : memref<1x1xf32, #tpu.memory_space<vmem>>, vector<1x1xf32>,
    } else {
    }
    %c0 = arith.constant 0 : index
    %c0_1 = arith.constant 0 : index
    %3 = vector.load %arg1[%c0, %c0_1] : memref<2x20xf32, #tpu.memory_space<vmem>>, vector<2x20xf32>
    %c0_2 = arith.constant 0 : index
    %c0_3 = arith.constant 0 : index
    %4 = vector.load %arg3[%c0_2, %c0_3] : memref<20x20xf32, #tpu.memory_space<vmem>>, vector<20x20xf32>
    %cst = arith.constant dense<0.000000e+00> : vector<2x20xf32>
    %5 = tpu.matmul %3, %4, %cst {dimension_numbers = #tpu.dot_dimension_numbers<[1], [0], [0], [1], [0, 0, 1, 1], [], []>} : vector<2x20xf32>, vector<20x20xf32>, vector<2x20xf32> -> vector<2x20xf32>
    %c0_4 = arith.constant 0 : index
    %c0_5 = arith.constant 0 : index
    %6 = vector.load %arg4[%c0_4, %c0_5] : memref<1x20xf32, #tpu.memory_space<vmem>>, vector<1x20xf32>
    %7 = vector.broadcast %6 : vector<1x20xf32> to vector<2x20xf32>
    %8 = arith.addf %5, %7 : vector<2x20xf32>
    %cst_6 = arith.constant 0.000000e+00 : f32
    %9 = vector.broadcast %cst_6 : f32 to vector<2x20xf32>
    %10 = arith.maximumf %8, %9 : vector<2x20xf32>
    %c0_7 = arith.constant 0 : index
    %c0_8 = arith.constant 0 : index
    %11 = vector.load %arg5[%c0_7, %c0_8] : memref<20x20xf32, #tpu.memory_space<vmem>>, vector<20x20xf32>
    %cst_9 = arith.constant dense<0.000000e+00> : vector<2x20xf32>
    %12 = tpu.matmul %10, %11, %cst_9 {dimension_numbers = #tpu.dot_dimension_numbers<[1], [0], [0], [1], [0, 0, 1, 1], [], []>} : vector<2x20xf32>, vector<20x20xf32>, vector<2x20xf32> -> vector<2x20xf32>
    %c0_10 = arith.constant 0 : index
    %c0_11 = arith.constant 0 : index
    %13 = vector.load %arg6[%c0_10, %c0_11] : memref<1x20xf32, #tpu.memory_space<vmem>>, vector<1x20xf32>
    %14 = vector.broadcast %13 : vector<1x20xf32> to vector<2x20xf32>
    %15 = arith.addf %12, %14 : vector<2x20xf32>
    %c0_12 = arith.constant 0 : index
    %c0_13 = arith.constant 0 : index
    %16 = vector.load %arg2[%c0_12, %c0_13] : memref<2x1xf32, #tpu.memory_space<vmem>>, vector<2x1xf32>
    %17 = vector.broadcast %16 : vector<2x1xf32> to vector<2x20xf32>
    %18 = arith.mulf %15, %17 : vector<2x20xf32>
    %19 = arith.mulf %18, %18 : vector<2x20xf32>
    %20 = tpu.concatenate %18, %19 in 0 : vector<2x20xf32>, vector<2x20xf32> -> vector<4x20xf32>
    %cst_14 = arith.constant dense<0.000000e+00> : vector<4xf32>
    %21 = vector.multi_reduction <add>, %20, %cst_14 [1] : vector<4x20xf32> to vector<4xf32>
    %22 = vector.shape_cast %21 : vector<4xf32> to vector<4x1xf32>
    %c0_15 = arith.constant 0 : index
    %c0_16 = arith.constant 0 : index
    %23 = vector.load %arg8[%c0_15, %c0_16] : memref<1x1xf32, #tpu.memory_space<vmem>>, vector<1x1xf32>
    %24 = vector.extract_strided_slice %22 {offsets = [0, 0], sizes = [2, 1], strides = [1, 1]} : vector<4x1xf32> to vector<2x1xf32>
    %cst_17 = arith.constant dense<0.000000e+00> : vector<1xf32>
    %25 = vector.multi_reduction <add>, %24, %cst_17 [0] : vector<2x1xf32> to vector<1xf32>
    %26 = vector.shape_cast %25 : vector<1xf32> to vector<1x1xf32>
    %27 = arith.addf %23, %26 : vector<1x1xf32>
    %c0_18 = arith.constant 0 : index
    %c0_19 = arith.constant 0 : index
    %28 = vector.load %arg8[%c0_18, %c0_19] : memref<1x1xf32, #tpu.memory_space<vmem>>, vector<1x1xf32>
    tpu.vector_store %arg8[%c0_18, %c0_19], %27 {strides = array<i32>} : memref<1x1xf32, #tpu.memory_space<vmem>>, vector<1x1xf32>,
    %c0_20 = arith.constant 0 : index
    %c0_21 = arith.constant 0 : index
    %29 = vector.load %arg9[%c0_20, %c0_21] : memref<1x1xf32, #tpu.memory_space<vmem>>, vector<1x1xf32>
    %30 = vector.extract_strided_slice %22 {offsets = [2, 0], sizes = [2, 1], strides = [1, 1]} : vector<4x1xf32> to vector<2x1xf32>
    %cst_22 = arith.constant dense<0.000000e+00> : vector<1xf32>
    %31 = vector.multi_reduction <add>, %30, %cst_22 [0] : vector<2x1xf32> to vector<1xf32>
    %32 = vector.shape_cast %31 : vector<1xf32> to vector<1x1xf32>
    %33 = arith.addf %29, %32 : vector<1x1xf32>
    %c0_23 = arith.constant 0 : index
    %c0_24 = arith.constant 0 : index
    %34 = vector.load %arg9[%c0_23, %c0_24] : memref<1x1xf32, #tpu.memory_space<vmem>>, vector<1x1xf32>
    tpu.vector_store %arg9[%c0_23, %c0_24], %33 {strides = array<i32>} : memref<1x1xf32, #tpu.memory_space<vmem>>, vector<1x1xf32>,
    %c0_i32_25 = arith.constant 0 : i32
    %35 = arith.cmpi eq, %arg0, %c0_i32_25 : i32
    %36 = arith.extui %35 : i1 to i32
    %c0_i32_26 = arith.constant 0 : i32
    %37 = arith.cmpi ne, %36, %c0_i32_26 : i32
    scf.if %37 {
      %c0_27 = arith.constant 0 : index
      %c0_28 = arith.constant 0 : index
      %38 = vector.load %arg8[%c0_27, %c0_28] : memref<1x1xf32, #tpu.memory_space<vmem>>, vector<1x1xf32>
      %c0_29 = arith.constant 0 : index
      %c0_30 = arith.constant 0 : index
      %39 = vector.load %arg9[%c0_29, %c0_30] : memref<1x1xf32, #tpu.memory_space<vmem>>, vector<1x1xf32>
      %40 = math.sqrt %39 : vector<1x1xf32>
      %41 = tpu.bitcast %40 : vector<1x1xf32> -> vector<1x1xi32>
      %c23_i32 = arith.constant 23 : i32
      %42 = vector.broadcast %c23_i32 : i32 to vector<1x1xi32>
      %43 = arith.shrsi %41, %42 : vector<1x1xi32>
      %c8388607_i32 = arith.constant 8388607 : i32
      %44 = vector.broadcast %c8388607_i32 : i32 to vector<1x1xi32>
      %45 = arith.andi %41, %44 : vector<1x1xi32>
      %c127_i32 = arith.constant 127 : i32
      %46 = vector.broadcast %c127_i32 : i32 to vector<1x1xi32>
      %47 = arith.subi %43, %46 : vector<1x1xi32>
      %c0_i32_31 = arith.constant 0 : i32
      %48 = vector.broadcast %c0_i32_31 : i32 to vector<1x1xi32>
      %49 = arith.cmpi ne, %45, %48 : vector<1x1xi32>
      %50 = arith.extui %49 : vector<1x1xi1> to vector<1x1xi32>
      %51 = arith.addi %47, %50 : vector<1x1xi32>
      %c0_i32_32 = arith.constant 0 : i32
      %c126_i32 = arith.constant 126 : i32
      %52 = vector.broadcast %c0_i32_32 : i32 to vector<1x1xi32>
      %53 = arith.maxsi %52, %51 : vector<1x1xi32>
      %54 = vector.broadcast %c126_i32 : i32 to vector<1x1xi32>
      %55 = arith.minsi %54, %53 : vector<1x1xi32>
      %c127_i32_33 = arith.constant 127 : i32
      %56 = vector.broadcast %c127_i32_33 : i32 to vector<1x1xi32>
      %57 = arith.subi %56, %55 : vector<1x1xi32>
      %c23_i32_34 = arith.constant 23 : i32
      %58 = vector.broadcast %c23_i32_34 : i32 to vector<1x1xi32>
      %59 = arith.shli %57, %58 : vector<1x1xi32>
      %60 = tpu.bitcast %59 : vector<1x1xi32> -> vector<1x1xf32>
      %61 = arith.mulf %40, %60 : vector<1x1xf32>
      %cst_35 = arith.constant 8.000000e-01 : f32
      %62 = vector.broadcast %cst_35 : f32 to vector<1x1xf32>
      %63 = arith.cmpf olt, %61, %62 : vector<1x1xf32>
      %cst_36 = arith.constant 1.000000e+01 : f32
      %64 = vector.broadcast %cst_36 : f32 to vector<1x1xf32>
      %65 = arith.mulf %60, %64 : vector<1x1xf32>
      %66 = arith.select %63, %65, %60 : vector<1x1xi1>, vector<1x1xf32>
      %67 = arith.mulf %38, %66 : vector<1x1xf32>
      %c0_37 = arith.constant 0 : index
      %c0_38 = arith.constant 0 : index
      %68 = vector.load %arg7[%c0_37, %c0_38] : memref<1x1xf32, #tpu.memory_space<vmem>>, vector<1x1xf32>
      tpu.vector_store %arg7[%c0_37, %c0_38], %67 {strides = array<i32>} : memref<1x1xf32, #tpu.memory_space<vmem>>, vector<1x1xf32>,
    } else {
    }
    return
  }
  func.func @transform_0(%arg0: i32) -> (i32, i32) {
    %c0_i32 = arith.constant 0 : i32
    %c0_i32_0 = arith.constant 0 : i32
    return %arg0, %c0_i32 : i32, i32
  }
  func.func @transform_1(%arg0: i32) -> (i32, i32) {
    %c0_i32 = arith.constant 0 : i32
    %c0_i32_0 = arith.constant 0 : i32
    return %arg0, %c0_i32 : i32, i32
  }
  func.func @transform_2(%arg0: i32) -> (i32, i32) {
    %c0_i32 = arith.constant 0 : i32
    %c0_i32_0 = arith.constant 0 : i32
    %c0_i32_1 = arith.constant 0 : i32
    return %c0_i32, %c0_i32_0 : i32, i32
  }
  func.func @transform_3(%arg0: i32) -> (i32, i32) {
    %c0_i32 = arith.constant 0 : i32
    %c0_i32_0 = arith.constant 0 : i32
    %c0_i32_1 = arith.constant 0 : i32
    return %c0_i32, %c0_i32_0 : i32, i32
  }
  func.func @transform_4(%arg0: i32) -> (i32, i32) {
    %c0_i32 = arith.constant 0 : i32
    %c0_i32_0 = arith.constant 0 : i32
    %c0_i32_1 = arith.constant 0 : i32
    return %c0_i32, %c0_i32_0 : i32, i32
  }
  func.func @transform_5(%arg0: i32) -> (i32, i32) {
    %c0_i32 = arith.constant 0 : i32
    %c0_i32_0 = arith.constant 0 : i32
    %c0_i32_1 = arith.constant 0 : i32
    return %c0_i32, %c0_i32_0 : i32, i32
  }
  func.func @transform_6(%arg0: i32) -> (i32, i32) {
    %c0_i32 = arith.constant 0 : i32
    %c0_i32_0 = arith.constant 0 : i32
    %c0_i32_1 = arith.constant 0 : i32
    return %c0_i32, %c0_i32_0 : i32, i32
  }
}

</mosaic_0001>

<llo_original>
// kernel: tpu_custom_call.1
$region0: #{tpu_custom_call.1}
  #allocation0 [shape = 'u32[]', space=smem, size = 0x4, offset = 0x4, fixed_abs, tag = 'smem constant byte address 0x4 - core index']
  #allocation1 [shape = 'u32[144,128]{1,0:T(1,128)}', space=vmem, size = 0x12000, scoped, tag = 'internal scratch']
  #allocation2 [shape = 'f32[1,1]{1,0:T(1,128)}', space=vmem, size = 0x200, scoped, tag = 'scratch operand']
  #allocation3 [shape = 'f32[1,1]{1,0:T(1,128)}', space=vmem, size = 0x200, scoped, tag = 'scratch operand']
  %s0 = inlined_call_operand.vmem [shape: f32[2,20], index: 0, kind: input, shape index: {}]
  %s1 = inlined_call_operand.vmem [shape: f32[2,1], index: 1, kind: input, shape index: {}]
  %s2 = inlined_call_operand.hbm [shape: f32[20,20], index: 2, kind: input, shape index: {}]
  %s3 = inlined_call_operand.vmem [shape: f32[1,20], index: 3, kind: input, shape index: {}]
  %s4 = inlined_call_operand.hbm [shape: f32[20,20], index: 4, kind: input, shape index: {}]
  %s5 = inlined_call_operand.vmem [shape: f32[1,20], index: 5, kind: input, shape index: {}]
  %s6 = inlined_call_operand.hbm [shape: f32[1,1], index: 6, kind: output, shape index: {}]
  %s7 = sld [smem:[#allocation0]]
  $region50: #{tpu_custom_call.1} parent=0
    _
  %s9 = ssub.s32 1, %s7
  %s10 = scalar_select 0, %s9, %s7
  $region1: #{tpu_custom_call.1} parent=0
    #allocation4 [shape = 'u8[12288]{0}', space=vmem, size = 0x3000, scoped, tag = 'input window, operand 2, single buffered']
    #allocation5 [shape = 's32[1]{0}', space=sflag, size = 0x4, scoped, tag = 'scoped memory for tpu_custom_call.1']
    #allocation6 [shape = 's32[1]{0}', space=sflag, size = 0x4, scoped, tag = 'scoped memory for tpu_custom_call.1']
    #allocation7 [shape = 'u8[12288]{0}', space=vmem, size = 0x3000, scoped, tag = 'input window, operand 4, single buffered']
    #allocation8 [shape = 's32[1]{0}', space=sflag, size = 0x4, scoped, tag = 'scoped memory for tpu_custom_call.1']
    #allocation9 [shape = 'u8[512]{0}', space=vmem, size = 0x400, scoped, tag = 'output window, operand 0, single buffered']
    %11 = vsyncpa [#allocation5], 0
    %12 = vsyncpa [#allocation8], 0
    %13 = vsyncpa [#allocation6], 0
    // Predicated region
    $region2: #{tpu_custom_call.1} parent=1 // pred_check
      _
    $region3: #{tpu_custom_call.1} parent=1 // pred_check_branch
      %15 = sbr.rel (0) target = $region5
    $region4: #{tpu_custom_call.1} parent=1 // pred_region
      _
    $region5: #{tpu_custom_call.1} parent=1 // pred_fallthru
      _
    // Predicated region
    $region6: #{tpu_custom_call.1} parent=1 // pred_check
      _
    $region7: #{tpu_custom_call.1} parent=1 // pred_check_branch
      %17 = sbr.rel (0) target = $region9
    $region8: #{tpu_custom_call.1} parent=1 // pred_region
      _
    $region9: #{tpu_custom_call.1} parent=1 // pred_fallthru
      _
    // Predicated region
    $region10: #{tpu_custom_call.1} parent=1 // pred_check
      _
    $region11: #{tpu_custom_call.1} parent=1 // pred_check_branch
      %19 = sbr.rel (0) target = $region13
    $region12: #{tpu_custom_call.1} parent=1 // pred_region
      %s21 = ssub.s32 384, 384
      %22 = vsyncadd [#allocation5], %s21
      %s23 = sshll.u32 [#allocation4], 4
      %s24 = int_to_ptr.vmem [resolvable:$true] %s23
      %29 = dma.hbm_to_vmem [thread:$0]  %s2, 384, %s24, [#allocation5], 128, 128, 8
    $region13: #{tpu_custom_call.1} parent=1 // pred_fallthru
      _
    // Predicated region
    $region14: #{tpu_custom_call.1} parent=1 // pred_check
      _
    $region15: #{tpu_custom_call.1} parent=1 // pred_check_branch
      %31 = sbr.rel (0) target = $region17
    $region16: #{tpu_custom_call.1} parent=1 // pred_region
      _
    $region17: #{tpu_custom_call.1} parent=1 // pred_fallthru
      _
    // Predicated region
    $region18: #{tpu_custom_call.1} parent=1 // pred_check
      _
    $region19: #{tpu_custom_call.1} parent=1 // pred_check_branch
      %33 = sbr.rel (0) target = $region21
    $region20: #{tpu_custom_call.1} parent=1 // pred_region
      %s35 = ssub.s32 384, 384
      %36 = vsyncadd [#allocation8], %s35
      %s37 = sshll.u32 [#allocation7], 4
      %s38 = int_to_ptr.vmem [resolvable:$true] %s37
      %43 = dma.hbm_to_vmem [thread:$0]  %s4, 384, %s38, [#allocation8], 128, 128, 8
    $region21: #{tpu_custom_call.1} parent=1 // pred_fallthru
      _
    // Predicated region
    $region22: #{tpu_custom_call.1} parent=1 // pred_check
      _
    $region23: #{tpu_custom_call.1} parent=1 // pred_check_branch
      %45 = sbr.rel (0) target = $region25
    $region24: #{tpu_custom_call.1} parent=1 // pred_region
      _
    $region25: #{tpu_custom_call.1} parent=1 // pred_fallthru
      _
    // Predicated region
    $region26: #{tpu_custom_call.1} parent=1 // pred_check
      _
    $region27: #{tpu_custom_call.1} parent=1 // pred_check_branch
      %47 = sbr.rel (0) target = $region29
    $region28: #{tpu_custom_call.1} parent=1 // pred_region
      %48 = dma.done [#allocation5], 384
    $region29: #{tpu_custom_call.1} parent=1 // pred_fallthru
      _
    // Predicated region
    $region30: #{tpu_custom_call.1} parent=1 // pred_check
      _
    $region31: #{tpu_custom_call.1} parent=1 // pred_check_branch
      %50 = sbr.rel (0) target = $region33
    $region32: #{tpu_custom_call.1} parent=1 // pred_region
      %51 = dma.done [#allocation8], 384
    $region33: #{tpu_custom_call.1} parent=1 // pred_fallthru
      _
    %p52 = scmp.eq.s32.totalorder 0, 0
    // Predicated region
    $region34: #{tpu_custom_call.1} parent=1 // pred_check
      %p53 = pneg %p52
    $region35: #{tpu_custom_call.1} parent=1 // pred_check_branch
      %55 = sbr.rel (%p53) target = $region37
    $region36: #{tpu_custom_call.1} parent=1 // pred_region
      %vm56 = vcmask 0
      %57 = vst.msk [vmem:[#allocation2] sm:$0x1] %vm56, 0.0
      %58 = vst.msk [vmem:[#allocation3] sm:$0x1] %vm56, 0.0
    $region37: #{tpu_custom_call.1} parent=1 // pred_fallthru
      _
    %v59 = vld [vmem:[%s0] sm:$0x3]
    %v60 = vld [vmem:[#allocation4] sm:$0xff]
    %v61 = vld [vmem:[#allocation4 + $0x8] sm:$0xff]
    %v62 = vld [vmem:[#allocation4 + $0x10] sm:$0xf]
    %v63 = vld [vmem:[%s3] sm:$0x1]
    %v65 = vlaneseq
    %v66 = vshrl.u32 %v65, 7
    %v67 = vsub.s32 0, %v66
    %v68 = vrot.slane %v63, %v67
    %vm70 = vcmask 162816
    %v72 = vsel %vm70, %v59, 0
    %vm74 = vcmask 1043456
    %v76 = vsel %vm74, %v62, 0
    %78 = vmatprep.subr.mxu0 0.0
    %79 = vmatpush1.msra.mxu0 %v60
    %80 = vmatprep.subr.mxu0 0.0
    %81 = vmatpush1.msra.mxu0 %v61
    %82 = vmatprep.subr.mxu0 0.0
    %83 = vmatpush1.msra.mxu0 %v76
    %84 = vmatprep.subr.mxu0 0.0
    %85 = vmatpush1.msra.mxu0 0.0
    %86 = vmatprep.subr.mxu0 0.0
    %87 = vmatpush1.msra.mxu0 0.0
    %88 = vmatprep.subr.mxu0 0.0
    %89 = vmatpush1.msra.mxu0 0.0
    %90 = vmatprep.subr.mxu0 0.0
    %91 = vmatpush1.msra.mxu0 0.0
    %92 = vmatprep.subr.mxu0 0.0
    %93 = vmatpush1.msra.mxu0 0.0
    %94 = vmatprep.subr.mxu0 0.0
    %95 = vmatpush1.msra.mxu0 0.0
    %96 = vmatprep.subr.mxu0 0.0
    %97 = vmatpush1.msra.mxu0 0.0
    %98 = vmatprep.subr.mxu0 0.0
    %99 = vmatpush1.msra.mxu0 0.0
    %100 = vmatprep.subr.mxu0 0.0
    %101 = vmatpush1.msra.mxu0 0.0
    %102 = vmatprep.subr.mxu0 0.0
    %103 = vmatpush1.msra.mxu0 0.0
    %104 = vmatprep.subr.mxu0 0.0
    %105 = vmatpush1.msra.mxu0 0.0
    %106 = vmatprep.subr.mxu0 0.0
    %107 = vmatpush1.msra.mxu0 0.0
    %108 = vmatprep.subr.mxu0 0.0
    %109 = vmatpush1.msra.mxu0 0.0
    %110 = vmatprep.subr.mxu0 0.0
    %111 = vmatpush1.msra.mxu0 0.0
    %112 = vmatprep.subr.mxu0 0.0
    %113 = vmatpush1.msra.mxu0 0.0
    %114 = vmatprep.subr.mxu0 0.0
    %115 = vmatpush1.msra.mxu0 0.0
    %116 = vmatprep.subr.mxu0 0.0
    %117 = vmatpush1.msra.mxu0 0.0
    %118 = vmatprep.subr.mxu0 0.0
    %119 = vmatpush1.msra.mxu0 0.0
    %120 = vmatprep.subr.mxu0 0.0
    %121 = vmatpush1.msra.mxu0 0.0
    %122 = vmatprep.subr.mxu0 0.0
    %123 = vmatpush1.msra.mxu0 0.0
    %124 = vmatprep.subr.mxu0 0.0
    %125 = vmatpush1.msra.mxu0 0.0
    %126 = vmatprep.subr.mxu0 0.0
    %127 = vmatpush1.msra.mxu0 0.0
    %128 = vmatprep.subr.mxu0 0.0
    %129 = vmatpush1.msra.mxu0 0.0
    %130 = vmatprep.subr.mxu0 0.0
    %131 = vmatpush1.msra.mxu0 0.0
    %132 = vmatprep.subr.mxu0 0.0
    %133 = vmatpush1.msra.mxu0 0.0
    %134 = vmatprep.subr.mxu0 0.0
    %135 = vmatpush1.msra.mxu0 0.0
    %136 = vmatprep.subr.mxu0 0.0
    %137 = vmatpush1.msra.mxu0 0.0
    %138 = vmatprep.subr.mxu0 0.0
    %139 = vmatpush1.msra.mxu0 0.0
    %140 = vmatprep.subr.mxu0 0.0
    %141 = vmatpush1.msra.mxu0 0.0
    %142 = vmatprep.mubr.f32.mxu0 0.0
    %143 = vmatmul.mubr.f32.gmra.mrb[0].mxu0 %v72
    %v144 = vpop.f32.mrb[0].mxu0
    %v145 = vadd.f32 %v68, %v144
    %v146 = vpop.f32.mrb[0].mxu0
    %147 = vdwg.mxu0
    %v148 = vmax.f32 %v145, 0.0
    %v149 = vld [vmem:[#allocation7] sm:$0xff]
    %v150 = vld [vmem:[#allocation7 + $0x8] sm:$0xff]
    %v151 = vld [vmem:[#allocation7 + $0x10] sm:$0xf]
    %v152 = vld [vmem:[%s5] sm:$0x1]
    %v154 = vlaneseq
    %v155 = vshrl.u32 %v154, 7
    %v156 = vsub.s32 0, %v155
    %v157 = vrot.slane %v152, %v156
    %v160 = vsel %vm70, %v148, 0
    %v163 = vsel %vm74, %v151, 0
    %165 = vmatprep.subr.mxu0 0.0
    %166 = vmatpush1.msra.mxu0 %v149
    %167 = vmatprep.subr.mxu0 0.0
    %168 = vmatpush1.msra.mxu0 %v150
    %169 = vmatprep.subr.mxu0 0.0
    %170 = vmatpush1.msra.mxu0 %v163
    %171 = vmatprep.subr.mxu0 0.0
    %172 = vmatpush1.msra.mxu0 0.0
    %173 = vmatprep.subr.mxu0 0.0
    %174 = vmatpush1.msra.mxu0 0.0
    %175 = vmatprep.subr.mxu0 0.0
    %176 = vmatpush1.msra.mxu0 0.0
    %177 = vmatprep.subr.mxu0 0.0
    %178 = vmatpush1.msra.mxu0 0.0
    %179 = vmatprep.subr.mxu0 0.0
    %180 = vmatpush1.msra.mxu0 0.0
    %181 = vmatprep.subr.mxu0 0.0
    %182 = vmatpush1.msra.mxu0 0.0
    %183 = vmatprep.subr.mxu0 0.0
    %184 = vmatpush1.msra.mxu0 0.0
    %185 = vmatprep.subr.mxu0 0.0
    %186 = vmatpush1.msra.mxu0 0.0
    %187 = vmatprep.subr.mxu0 0.0
    %188 = vmatpush1.msra.mxu0 0.0
    %189 = vmatprep.subr.mxu0 0.0
    %190 = vmatpush1.msra.mxu0 0.0
    %191 = vmatprep.subr.mxu0 0.0
    %192 = vmatpush1.msra.mxu0 0.0
    %193 = vmatprep.subr.mxu0 0.0
    %194 = vmatpush1.msra.mxu0 0.0
    %195 = vmatprep.subr.mxu0 0.0
    %196 = vmatpush1.msra.mxu0 0.0
    %197 = vmatprep.subr.mxu0 0.0
    %198 = vmatpush1.msra.mxu0 0.0
    %199 = vmatprep.subr.mxu0 0.0
    %200 = vmatpush1.msra.mxu0 0.0
    %201 = vmatprep.subr.mxu0 0.0
    %202 = vmatpush1.msra.mxu0 0.0
    %203 = vmatprep.subr.mxu0 0.0
    %204 = vmatpush1.msra.mxu0 0.0
    %205 = vmatprep.subr.mxu0 0.0
    %206 = vmatpush1.msra.mxu0 0.0
    %207 = vmatprep.subr.mxu0 0.0
    %208 = vmatpush1.msra.mxu0 0.0
    %209 = vmatprep.subr.mxu0 0.0
    %210 = vmatpush1.msra.mxu0 0.0
    %211 = vmatprep.subr.mxu0 0.0
    %212 = vmatpush1.msra.mxu0 0.0
    %213 = vmatprep.subr.mxu0 0.0
    %214 = vmatpush1.msra.mxu0 0.0
    %215 = vmatprep.subr.mxu0 0.0
    %216 = vmatpush1.msra.mxu0 0.0
    %217 = vmatprep.subr.mxu0 0.0
    %218 = vmatpush1.msra.mxu0 0.0
    %219 = vmatprep.subr.mxu0 0.0
    %220 = vmatpush1.msra.mxu0 0.0
    %221 = vmatprep.subr.mxu0 0.0
    %222 = vmatpush1.msra.mxu0 0.0
    %223 = vmatprep.subr.mxu0 0.0
    %224 = vmatpush1.msra.mxu0 0.0
    %225 = vmatprep.subr.mxu0 0.0
    %226 = vmatpush1.msra.mxu0 0.0
    %227 = vmatprep.subr.mxu0 0.0
    %228 = vmatpush1.msra.mxu0 0.0
    %229 = vmatprep.mubr.f32.mxu0 0.0
    %230 = vmatmul.mubr.f32.gmra.mrb[0].mxu0 %v160
    %v231 = vpop.f32.mrb[0].mxu0
    %v232 = vadd.f32 %v157, %v231
    %v233 = vpop.f32.mrb[0].mxu0
    %234 = vdwg.mxu0
    %v235 = vld [vmem:[%s1] sm:$0x3]
    %237 = vset.pattern.permute.xlu0 0
    %238 = vperm.xlu0 %237, %v235
    %v239 = vpop.permute.xlu0 %238
    %v241 = vmul.f32 %v232, %v239
    %v242 = vmul.f32 %v241, %v241
    %v244 = vrot.slane %v242, 6
    %vm246 = vcmask 1041408
    %v247 = vsel %vm246, %v241, %v244
    %vm248 = vcmask 158720
    %v249 = vsel %vm248, %v247, 0.0
    %250 = vadd.xlane.f32.xlu0 %v249
    %v251 = vpop.xlane.xlu0 %250
    %v252 = vld [vmem:[#allocation2] sm:$0x1]
    %v253 = vsel %vm246, %v251, 0.0
    %v254 = vrot.slane %v253, 4
    %v255 = vadd.f32 %v253, %v254
    %v256 = vrot.slane %v255, 2
    %v257 = vadd.f32 %v255, %v256
    %v258 = vrot.slane %v257, 1
    %v259 = vadd.f32 %v257, %v258
    %v260 = vadd.f32 %v252, %v259
    %vm261 = vcmask 0
    %262 = vst.msk [vmem:[#allocation2] sm:$0x1] %vm261, %v260
    %v263 = vld [vmem:[#allocation3] sm:$0x1]
    %v265 = vrot.slane %v251, 2
    %v267 = vsel %vm246, %v265, 0.0
    %v268 = vrot.slane %v267, 4
    %v269 = vadd.f32 %v267, %v268
    %v270 = vrot.slane %v269, 2
    %v271 = vadd.f32 %v269, %v270
    %v272 = vrot.slane %v271, 1
    %v273 = vadd.f32 %v271, %v272
    %v274 = vadd.f32 %v263, %v273
    %275 = vst.msk [vmem:[#allocation3] sm:$0x1] %vm261, %v274
    // Predicated region
    $region38: #{tpu_custom_call.1} parent=1 // pred_check
      %p276 = pneg %p52
    $region39: #{tpu_custom_call.1} parent=1 // pred_check_branch
      %278 = sbr.rel (%p276) target = $region41
    $region40: #{tpu_custom_call.1} parent=1 // pred_region
      %v279 = vld [vmem:[#allocation2] sm:$0x1]
      %v280 = vld [vmem:[#allocation3] sm:$0x1]
      %v281 = vrsqrt.pop %v280
      %v282 = vmul.f32 %v280, %v281
      %vm283 = vcmp.eq.f32.partialorder %v280, inf
      %v284 = vsel %vm283, %v280, %v282
      %vm285 = vcmp.eq.f32.partialorder %v280, 0.0
      %v286 = vand.u32 %v280, 2147483648
      %v287 = vsel %vm285, %v286, %v284
      %v289 = vshra.s32 %v287, 23
      %v290 = vand.u32 %v287, 8388607
      %v291 = vsub.s32 %v289, 127
      %vm292 = vcmp.ne.s32.totalorder %v290, 0
      %v293 = vsel %vm292, 1, 0
      %v294 = vadd.s32 %v291, %v293
      %vm295 = vcmp.gt.s32.totalorder %v294, 0
      %v296 = vsel %vm295, %v294, 0
      %vm297 = vcmp.lt.s32.totalorder %v296, 126
      %v298 = vsel %vm297, %v296, 126
      %v299 = vsub.s32 127, %v298
      %v300 = vshll.u32 %v299, 23
      %v302 = vmul.f32 %v287, %v300
      %vm303 = vcmp.lt.f32.partialorder %v302, 0.8
      %v304 = vmul.f32 %v300, 10.0
      %v305 = vsel %vm303, %v304, %v300
      %v306 = vmul.f32 %v279, %v305
      %307 = vst.msk [vmem:[#allocation9] sm:$0x1] %vm261, %v306
    $region41: #{tpu_custom_call.1} parent=1 // pred_fallthru
      _
    // Predicated region
    $region42: #{tpu_custom_call.1} parent=1 // pred_check
      _
    $region43: #{tpu_custom_call.1} parent=1 // pred_check_branch
      %309 = sbr.rel (0) target = $region45
    $region44: #{tpu_custom_call.1} parent=1 // pred_region
      %s311 = ssub.s32 16, 16
      %312 = vsyncadd [#allocation6], %s311
      %s314 = sshll.u32 [#allocation9], 4
      %s315 = int_to_ptr.vmem [resolvable:$true] %s314
      %317 = dma.vmem_to_hbm [thread:$0]  %s315, 16, %s6, [#allocation6]
    $region45: #{tpu_custom_call.1} parent=1 // pred_fallthru
      _
    // Predicated region
    $region46: #{tpu_custom_call.1} parent=1 // pred_check
      _
    $region47: #{tpu_custom_call.1} parent=1 // pred_check_branch
      %319 = sbr.rel (0) target = $region49
    $region48: #{tpu_custom_call.1} parent=1 // pred_region
      %320 = dma.done [#allocation6], 16
    $region49: #{tpu_custom_call.1} parent=1 // pred_fallthru
      _
    %321 = vsyncpa [#allocation5], 1
    %322 = vsyncpa [#allocation8], 1
    %323 = vsyncpa [#allocation6], 1

</llo_original>
